<compile_context>
chip_gen: v7x
topology: tpu7x:2x2x1
jax: 0.10.0
libtpu: 0.0.40
codegen_flags: <defaults>
</compile_context>

<pallas_src>
import math

import jax
import jax.numpy as jnp
from jax.experimental import pallas as pl
from jax.experimental.pallas import tpu as pltpu

_LANE = 128
_SUBLANE = 8
_FASTPATH_BYTES = 1 << 20  # below this, plain XLA fuses the op better than a launch


def _round_up(x, m):
    return ((x + m - 1) // m) * m


# ---------------------------------------------------------------------------
# Kernels (pure VPU/EUP elementwise on lane-dense tiles).
# ---------------------------------------------------------------------------
def _addbias_kernel(x_ref, b_ref, o_ref):
    # (row_tile, w) + (1, w) broadcast.
    o_ref[...] = x_ref[...] + b_ref[...]


def _bcast_exp_kernel(b_ref, o_ref):
    # Write-only DiagGaussian scale: exp() on a single bias row, broadcast out.
    o_ref[...] = jnp.broadcast_to(jnp.exp(b_ref[...]), o_ref.shape)


# ---------------------------------------------------------------------------
# Tiling / launch helpers.
# ---------------------------------------------------------------------------
def _tile_bytes_cap():
    """Per-buffer tile-byte cap, tuned per TPU generation (safe fallback 4 MiB)."""
    try:
        kind = jax.devices()[0].device_kind.lower()
    except Exception:
        kind = ""
    if "v5 lite" in kind or "v5lite" in kind or "v5e" in kind:
        return 2 << 20      # v5e: 16 MiB scoped default; stay modest
    if "v7" in kind:
        return 8 << 20      # v7x: 3.2 TB/s HBM -> amortize ~0.35us/step overhead
    return 4 << 20          # v6e / unknown


def _pick_w_tile(W, itemsize, cap_bytes):
    if W % _LANE != 0:
        # TODO(synk): non-lane-aligned width (and N not divisible by the regroup
        # factor) falls back to one full-width block with masked lane stores;
        # fine for this module's small widths.
        return W
    max_w = max(_LANE, (cap_bytes // (_SUBLANE * itemsize)) // _LANE * _LANE)
    w_tile = min(W, max_w)
    while W % w_tile != 0:          # prefer a clean divisor; terminates at 128
        w_tile -= _LANE
    return w_tile


def _pick_row_tile(R, w_tile, itemsize, cap_bytes):
    if R <= _SUBLANE:
        return R                    # single block; row dim equals full array dim
    rows_cap = max(_SUBLANE,
                   (cap_bytes // max(w_tile * itemsize, 1)) // _SUBLANE * _SUBLANE)
    # Keep >= 2 row tiles so v7x's two TensorCores both get work on the
    # "parallel" row axis.
    half = _round_up(-(-R // 2), _SUBLANE)
    return max(_SUBLANE, min(rows_cap, half))


def _lane_dense_group(N, W):
    """Rows folded together so g*W is a multiple of 128 (exact, copy-free)."""
    if W % _LANE == 0:
        return 1
    g = _LANE // math.gcd(W, _LANE)
    return g if (g > 1 and N % g == 0) else 1


def _launch_elementwise(kernel, out_rows_cols, dtype, bias_row, x2d=None):
    """Run a row-broadcast elementwise kernel over an (R, W) output.

    bias_row: (W,) lane row, kept resident (block index 0 along rows).
    x2d:      optional (R, W) streamed input (AddBias); None for write-only.
    """
    R, W = out_rows_cols
    itemsize = jnp.dtype(dtype).itemsize
    cap = _tile_bytes_cap()
    w_tile = _pick_w_tile(W, itemsize, cap)
    row_tile = _pick_row_tile(R, w_tile, itemsize, cap)
    grid = (pl.cdiv(R, row_tile), pl.cdiv(W, w_tile))

    b2d = bias_row.reshape(1, W).astype(dtype)

    # Explicit VMEM budget from the actual double-buffered tile sizes.
    tile_bytes = row_tile * w_tile * itemsize
    bias_tile_bytes = _SUBLANE * w_tile * itemsize      # 1 row pads to 8 sublanes
    n_stream = 2 if x2d is not None else 1              # (x + out) or (out only)
    needed = 2 * (n_stream * tile_bytes + bias_tile_bytes)
    vmem_limit = int(max(needed + (2 << 20), 16 << 20))

    bias_spec = pl.BlockSpec((1, w_tile), lambda i, j: (0, j))
    io_spec = pl.BlockSpec((row_tile, w_tile), lambda i, j: (i, j))

    if x2d is not None:
        in_specs = [io_spec, bias_spec]
        args = (x2d, b2d)
    else:
        in_specs = [bias_spec]
        args = (b2d,)

    return pl.pallas_call(
        kernel,
        out_shape=jax.ShapeDtypeStruct((R, W), dtype),
        grid=grid,
        in_specs=in_specs,
        out_specs=io_spec,
        compiler_params=pltpu.CompilerParams(
            dimension_semantics=("parallel", "parallel"),
            vmem_limit_bytes=vmem_limit),
    )(*args)


# ---------------------------------------------------------------------------
# AddBias.forward
# ---------------------------------------------------------------------------
def add_bias(x, bias_param, *, force_pallas=False):
    """Pallas equivalent of AddBias.forward.

    bias_param: (C,) or (C, 1)  (matches nn.Parameter(bias.unsqueeze(1)))
    x:          (N, C) or (N, C, H, W)
    """
    C = bias_param.shape[0]
    bias_row = bias_param.reshape(C).astype(x.dtype)

    if x.ndim == 2:
        N, Cx = x.shape
        assert Cx == C, "channel mismatch between x and bias"
        x2d, brow = x, bias_row
    elif x.ndim == 4:
        N, Cx, H, W = x.shape
        assert Cx == C, "channel mismatch between x and bias"
        x2d = x.reshape(N, C * H * W)                  # free NCHW row-major flatten
        brow = jnp.repeat(bias_row, H * W)             # per-channel repeat
    else:
        raise ValueError(f"AddBias expects 2D or 4D input, got {x.ndim}D")

    Wd = x2d.shape[1]

    # Tiny inputs: one fused XLA elementwise pass beats any kernel launch.
    if not force_pallas and x2d.size * jnp.dtype(x2d.dtype).itemsize < _FASTPATH_BYTES:
        out2d = x2d + brow.reshape(1, Wd)
        return out2d.reshape(x.shape)

    g = _lane_dense_group(N, Wd)
    if g > 1:
        # Exact, copy-free regroup to a lane-dense (N/g, g*W) layout.
        out_dense = _launch_elementwise(
            _addbias_kernel, (N // g, g * Wd), x2d.dtype,
            jnp.tile(brow, (g,)), x2d=x2d.reshape(N // g, g * Wd))
        out2d = out_dense.reshape(N, Wd)
    else:
        out2d = _launch_elementwise(_addbias_kernel, (N, Wd), x2d.dtype, brow, x2d=x2d)

    return out2d.reshape(x.shape)


# ---------------------------------------------------------------------------
# DiagGaussian.forward
# ---------------------------------------------------------------------------
def diag_gaussian_forward(action_mean, logstd_bias, *, force_pallas=False):
    """Pallas equivalent of DiagGaussian.forward.

    logstd_bias: (num_outputs,) or (num_outputs, 1) parameter (zeros at init).
    Returns (loc, scale) of the Normal distribution.
    """
    C = logstd_bias.shape[0]
    cond = jnp.mean(logstd_bias) >= -2.5
    # cond False => action_logstd = zeros - 2.5 == constant -2.5 bias; fold both
    # branches into one effective per-channel bias.
    eff_bias = jnp.where(cond, logstd_bias.reshape(C),
                         jnp.full((C,), -2.5, dtype=logstd_bias.dtype))
    eff_bias = eff_bias.astype(action_mean.dtype)

    shape = action_mean.shape
    if action_mean.ndim == 2:
        N, Cx = shape
        brow = eff_bias
    elif action_mean.ndim == 4:
        N, Cx, H, W = shape
        brow = jnp.repeat(eff_bias, H * W)
    else:
        raise ValueError(f"DiagGaussian expects 2D or 4D mean, got {action_mean.ndim}D")
    assert Cx == C, "channel mismatch between action_mean and logstd bias"
    Wd = brow.shape[0]

    itemsize = jnp.dtype(action_mean.dtype).itemsize
    if not force_pallas and N * Wd * itemsize < _FASTPATH_BYTES:
        scale2d = jnp.broadcast_to(jnp.exp(brow).reshape(1, Wd), (N, Wd))
    else:
        # Write-only broadcast kernel: no zeros tensor is ever read.
        g = _lane_dense_group(N, Wd)
        if g > 1:
            scale2d = _launch_elementwise(
                _bcast_exp_kernel, (N // g, g * Wd), action_mean.dtype,
                jnp.tile(brow, (g,))).reshape(N, Wd)
        else:
            scale2d = _launch_elementwise(
                _bcast_exp_kernel, (N, Wd), action_mean.dtype, brow)

    # TODO(synk): the FixedNormal distribution object itself (sample/log_prob)
    # is not a kernel; we return its parameters (loc, scale).
    return action_mean, scale2d.reshape(shape)


if __name__ == "__main__":
    key = jax.random.PRNGKey(0)
    k_mean, k_b, k_x4, k_big = jax.random.split(key, 4)

    num_outputs = 4
    N = 8
    action_mean = jax.random.normal(k_mean, (N, num_outputs), dtype=jnp.float32)

    # (a) DiagGaussian as initialised: logstd bias = zeros -> cond True, scale = 1.
    bias0 = jnp.zeros((num_outputs, 1), dtype=jnp.float32)
    loc, scale = diag_gaussian_forward(action_mean, bias0, force_pallas=True)
    jax.block_until_ready((loc, scale))
    assert jnp.allclose(loc, action_mean), "loc mismatch"
    assert jnp.allclose(scale, jnp.ones_like(action_mean), atol=1e-6), "init scale mismatch"

    # (b) random bias with mean >= -2.5 -> scale = exp(bias) broadcast per row.
    bias_r = 0.1 * jax.random.normal(k_b, (num_outputs, 1), dtype=jnp.float32)
    _, scale = diag_gaussian_forward(action_mean, bias_r, force_pallas=True)
    scale = jax.block_until_ready(scale)
    ref_scale = jnp.broadcast_to(jnp.exp(bias_r.reshape(1, -1)), action_mean.shape)
    assert jnp.allclose(scale, ref_scale, atol=1e-6, rtol=1e-6), "scale mismatch (cond True)"

    # (c) bias with mean < -2.5 -> logstd clamped to -2.5.
    bias_low = bias_r - 5.0
    _, scale = diag_gaussian_forward(action_mean, bias_low, force_pallas=True)
    scale = jax.block_until_ready(scale)
    assert jnp.allclose(scale, jnp.full_like(action_mean, jnp.exp(-2.5)),
                        atol=1e-6, rtol=1e-6), "scale mismatch (cond False)"

    # (d) lane-dense regrouped write-only broadcast path (N divisible by g=32).
    am_big = jax.random.normal(k_big, (256, num_outputs), dtype=jnp.float32)
    _, scale = diag_gaussian_forward(am_big, bias_r, force_pallas=True)
    scale = jax.block_until_ready(scale)
    ref_big = jnp.broadcast_to(jnp.exp(bias_r.reshape(1, -1)), am_big.shape)
    assert jnp.allclose(scale, ref_big, atol=1e-6, rtol=1e-6), "scale mismatch (dense)"

    # (e) standalone AddBias kernel: 2D unaligned, 2D lane-dense, and 4D paths.
    y2 = jax.block_until_ready(add_bias(action_mean, bias_r, force_pallas=True))
    assert jnp.allclose(y2, action_mean + bias_r.reshape(1, -1), atol=1e-6), "2D AddBias mismatch"

    x2_big = jax.random.normal(k_mean, (64, num_outputs), dtype=jnp.float32)
    y2b = jax.block_until_ready(add_bias(x2_big, bias_r, force_pallas=True))
    assert jnp.allclose(y2b, x2_big + bias_r.reshape(1, -1), atol=1e-6), "2D dense AddBias mismatch"

    x4 = jax.random.normal(k_x4, (2, num_outputs, 16, 16), dtype=jnp.float32)
    y4 = jax.block_until_ready(add_bias(x4, bias_r, force_pallas=True))
    assert jnp.allclose(y4, x4 + bias_r.reshape(1, -1, 1, 1), atol=1e-6), "4D AddBias mismatch"

    # (f) small-input fast path (no Pallas) agrees with the kernel path.
    _, scale_fast = diag_gaussian_forward(action_mean, bias_r)
    assert jnp.allclose(jax.block_until_ready(scale_fast), ref_scale,
                        atol=1e-6, rtol=1e-6), "fast-path mismatch"

    print("KERNEL_OK")
</pallas_src>

<mosaic_0001>
module attributes {stable_mosaic.version = 11 : i64} {
  func.func @_bcast_exp_kernel(%arg0: i32, %arg1: i32, %arg2: memref<1x4xf32, #tpu.memory_space<vmem>>, %arg3: memref<8x4xf32, #tpu.memory_space<vmem>>) attributes {dimension_semantics = [#tpu.dimension_semantics<parallel>, #tpu.dimension_semantics<parallel>], iteration_bounds = array<i64: 1, 1>, scalar_prefetch = 0 : i64, scratch_operands = 0 : i64, tpu.core_type = #tpu.core_type<tc>, window_params = [{transform_indices = @transform_0, window_bounds = array<i64: 1, 4>}, {transform_indices = @transform_1, window_bounds = array<i64: 8, 4>}]} {
    %c0 = arith.constant 0 : index
    %c0_0 = arith.constant 0 : index
    %0 = vector.load %arg2[%c0, %c0_0] : memref<1x4xf32, #tpu.memory_space<vmem>>, vector<1x4xf32>
    %1 = math.exp %0 : vector<1x4xf32>
    %2 = vector.shape_cast %1 : vector<1x4xf32> to vector<1x4xf32>
    %3 = vector.broadcast %2 : vector<1x4xf32> to vector<8x4xf32>
    %c0_1 = arith.constant 0 : index
    %c0_2 = arith.constant 0 : index
    %4 = vector.load %arg3[%c0_1, %c0_2] : memref<8x4xf32, #tpu.memory_space<vmem>>, vector<8x4xf32>
    tpu.vector_store %arg3[%c0_1, %c0_2], %3 {strides = array<i32>} : memref<8x4xf32, #tpu.memory_space<vmem>>, vector<8x4xf32>,
    return
  }
  func.func @transform_0(%arg0: i32, %arg1: i32) -> (i32, i32) {
    %c0_i32 = arith.constant 0 : i32
    %c0_i32_0 = arith.constant 0 : i32
    return %c0_i32, %arg1 : i32, i32
  }
  func.func @transform_1(%arg0: i32, %arg1: i32) -> (i32, i32) {
    %c0_i32 = arith.constant 0 : i32
    return %arg0, %arg1 : i32, i32
  }
}

</mosaic_0001>

<llo_original>
// kernel: tpu_custom_call.1
$region0: #{tpu_custom_call.1}
  #allocation0 [shape = 'u32[]', space=smem, size = 0x4, offset = 0x4, fixed_abs, tag = 'smem constant byte address 0x4 - core index']
  #allocation1 [shape = 'u32[144,128]{1,0:T(1,128)}', space=vmem, size = 0x12000, scoped, tag = 'internal scratch']
  %s0 = inlined_call_operand.hbm [shape: f32[1,4], index: 0, kind: input, shape index: {}]
  %s1 = inlined_call_operand.vmem [shape: f32[8,4], index: 1, kind: output, shape index: {}]
  %s2 = sld [smem:[#allocation0]]
  $region18: #{tpu_custom_call.1} parent=0
    _
  %s4 = ssub.s32 1, %s2
  %s5 = scalar_select 0, %s4, %s2
  $region1: #{tpu_custom_call.1} parent=0
    #allocation2 [shape = 'u8[512]{0}', space=vmem, size = 0x400, scoped, tag = 'input window, operand 0, single buffered']
    #allocation3 [shape = 's32[1]{0}', space=sflag, size = 0x4, scoped, tag = 'scoped memory for tpu_custom_call.1']
    %6 = vsyncpa [#allocation3], 0
    // Predicated region
    $region2: #{tpu_custom_call.1} parent=1 // pred_check
      _
    $region3: #{tpu_custom_call.1} parent=1 // pred_check_branch
      %8 = sbr.rel (0) target = $region5
    $region4: #{tpu_custom_call.1} parent=1 // pred_region
      %s10 = ssub.s32 16, 16
      %11 = vsyncadd [#allocation3], %s10
      %s13 = sshll.u32 [#allocation2], 4
      %s14 = int_to_ptr.vmem [resolvable:$true] %s13
      %16 = dma.hbm_to_vmem [thread:$0]  %s0, 16, %s14, [#allocation3]
    $region5: #{tpu_custom_call.1} parent=1 // pred_fallthru
      _
    // Predicated region
    $region6: #{tpu_custom_call.1} parent=1 // pred_check
      _
    $region7: #{tpu_custom_call.1} parent=1 // pred_check_branch
      %18 = sbr.rel (0) target = $region9
    $region8: #{tpu_custom_call.1} parent=1 // pred_region
      %19 = dma.done [#allocation3], 16
    $region9: #{tpu_custom_call.1} parent=1 // pred_fallthru
      _
    %v20 = vld [vmem:[#allocation2] sm:$0x1]
    %v21 = vmul.f32 %v20, 1.442695
    %v22 = vpow.pop %v21
    %v24 = vlaneseq
    %v25 = vshrl.u32 %v24, 7
    %v26 = vsub.s32 0, %v25
    %v27 = vrot.slane %v22, %v26
    %vm29 = vcmask 31744
    %30 = vst.msk [vmem:[%s1] sm:$0xff] %vm29, %v27
    // Predicated region
    $region10: #{tpu_custom_call.1} parent=1 // pred_check
      _
    $region11: #{tpu_custom_call.1} parent=1 // pred_check_branch
      %32 = sbr.rel (0) target = $region13
    $region12: #{tpu_custom_call.1} parent=1 // pred_region
      _
    $region13: #{tpu_custom_call.1} parent=1 // pred_fallthru
      _
    // Predicated region
    $region14: #{tpu_custom_call.1} parent=1 // pred_check
      _
    $region15: #{tpu_custom_call.1} parent=1 // pred_check_branch
      %34 = sbr.rel (0) target = $region17
    $region16: #{tpu_custom_call.1} parent=1 // pred_region
      _
    $region17: #{tpu_custom_call.1} parent=1 // pred_fallthru
      _
    %35 = vsyncpa [#allocation3], 1

</llo_original>
